<compile_context>
chip_gen: v5e
topology: v5e:2x2
jax: 0.10.0
libtpu: 0.0.40
codegen_flags: <defaults>
</compile_context>

<pallas_src>
import functools

import jax
import jax.numpy as jnp
from jax.experimental import pallas as pl
from jax.experimental.pallas import tpu as pltpu


def _round_up(x: int, m: int) -> int:
    return ((x + m - 1) // m) * m


def _default_tiles() -> tuple[int, int, int]:
    """Per-generation MXU/VMEM-aware default tile sizes (tm, tn, tk)."""
    try:
        kind = jax.devices()[0].device_kind.lower()
    except Exception:  # pragma: no cover - defensive
        kind = ""
    if "v5 lite" in kind or "v5e" in kind or "v5litepod" in kind:
        # v5e: 4x128^2 MXU, single vector-store slot -> 128-aligned M/N, large K.
        return 128, 128, 512
    # v6e / v7x: 2x256^2 MXU. Tiles small enough to double-buffer well inside
    # v7x's 64 MiB VMEM while filling the systolic array.
    return 256, 256, 512


def _matmul_kernel(a_ref, b_ref, o_ref, acc_ref, *, apply_relu: bool):
    """One (tm, tn) output tile: accumulate over the K grid axis, fused ReLU on finalize."""

    @pl.when(pl.program_id(2) == 0)
    def _init():
        acc_ref[...] = jnp.zeros_like(acc_ref)

    acc_ref[...] += jnp.dot(
        a_ref[...], b_ref[...], preferred_element_type=jnp.float32
    )

    @pl.when(pl.program_id(2) == pl.num_programs(2) - 1)
    def _finalize():
        out = acc_ref[...]
        if apply_relu:
            out = jnp.maximum(out, 0.0)
        o_ref[...] = out.astype(o_ref.dtype)


def pallas_matmul(
    a: jax.Array,
    b: jax.Array,
    *,
    apply_relu: bool = False,
    tm: int | None = None,
    tn: int | None = None,
    tk: int | None = None,
    compute_dtype=None,
    out_dtype=jnp.float32,
) -> jax.Array:
    """C = A @ B (optionally relu(A @ B)) via a tiled Pallas TPU kernel.

    A: [M, K], B: [K, N]. Any shapes are accepted: operands are zero-padded to
    tile multiples and the result is sliced back to [M, N].
    """
    M, K = a.shape
    K2, N = b.shape
    assert K == K2, (a.shape, b.shape)

    dtm, dtn, dtk = _default_tiles()
    tm = tm or dtm
    tn = tn or dtn
    tk = tk or dtk

    if compute_dtype is not None:
        a = a.astype(compute_dtype)
        b = b.astype(compute_dtype)
    cdtype = a.dtype

    # Effective tiles: never larger than the (hardware-aligned) padded problem.
    tm_eff = min(tm, _round_up(M, 8))      # sublane multiple
    tn_eff = min(tn, _round_up(N, 128))    # lane-dense output stores
    tk_eff = min(tk, _round_up(K, 128))

    Mp = _round_up(M, tm_eff)
    Np = _round_up(N, tn_eff)
    Kp = _round_up(K, tk_eff)

    a_p = a if (Mp == M and Kp == K) else jnp.pad(a, ((0, Mp - M), (0, Kp - K)))
    b_p = b if (Kp == K and Np == N) else jnp.pad(b, ((0, Kp - K), (0, Np - N)))

    grid = (Mp // tm_eff, Np // tn_eff, Kp // tk_eff)

    in_itemsize = jnp.dtype(cdtype).itemsize
    out_itemsize = jnp.dtype(out_dtype).itemsize

    # Working set: double-buffered A and B tiles + double-buffered output tile + f32 acc.
    work_bytes = (
        2 * (tm_eff * tk_eff + tk_eff * tn_eff) * in_itemsize
        + 2 * tm_eff * tn_eff * out_itemsize
        + tm_eff * tn_eff * 4
    )
    vmem_limit = int(min(max(2 * work_bytes, 32 * 1024 * 1024), 48 * 1024 * 1024))

    cost = pl.CostEstimate(
        flops=2 * Mp * Np * Kp,
        transcendentals=0,
        bytes_accessed=(Mp * Kp + Kp * Np) * in_itemsize + Mp * Np * out_itemsize,
    )

    out = pl.pallas_call(
        functools.partial(_matmul_kernel, apply_relu=apply_relu),
        out_shape=jax.ShapeDtypeStruct((Mp, Np), out_dtype),
        grid_spec=pltpu.PrefetchScalarGridSpec(
            num_scalar_prefetch=0,
            grid=grid,
            in_specs=[
                pl.BlockSpec((tm_eff, tk_eff), lambda i, j, k: (i, k)),
                pl.BlockSpec((tk_eff, tn_eff), lambda i, j, k: (k, j)),
            ],
            out_specs=pl.BlockSpec((tm_eff, tn_eff), lambda i, j, k: (i, j)),
            scratch_shapes=[pltpu.VMEM((tm_eff, tn_eff), jnp.float32)],
        ),
        compiler_params=pltpu.CompilerParams(
            dimension_semantics=("parallel", "parallel", "arbitrary"),
            vmem_limit_bytes=vmem_limit,
        ),
        cost_estimate=cost,
    )(a_p, b_p)

    if Mp != M or Np != N:
        out = out[:M, :N]
    return out


def init_gnn_layer_params(key, in_features: int, out_features: int) -> jax.Array:
    """Xavier-uniform init, matching torch.nn.init.xavier_uniform_."""
    bound = (6.0 / (in_features + out_features)) ** 0.5
    return jax.random.uniform(
        key, (in_features, out_features), dtype=jnp.float32, minval=-bound, maxval=bound
    )


def gnn_layer_forward(
    features: jax.Array,
    adj: jax.Array,
    weight: jax.Array,
    active: bool = True,
    *,
    tm: int | None = None,
    tn: int | None = None,
    tk: int | None = None,
    compute_dtype=None,
) -> jax.Array:
    """Pallas implementation of GNNLayer.forward.

    relu(adj @ (features @ W)); when in_features <= out_features the matmuls are
    reassociated to (adj @ features) @ W (identical math, fewer FLOPs in the N^2
    matmul and a smaller HBM intermediate).
    """
    in_f = features.shape[1]
    out_f = weight.shape[1]
    kw = dict(tm=tm, tn=tn, tk=tk, compute_dtype=compute_dtype)

    if in_f <= out_f:
        agg = pallas_matmul(adj, features, apply_relu=False, **kw)
        output = pallas_matmul(agg, weight, apply_relu=active, **kw)
    else:
        support = pallas_matmul(features, weight, apply_relu=False, **kw)
        output = pallas_matmul(adj, support, apply_relu=active, **kw)
    return output


if __name__ == "__main__":
    num_nodes = 16
    in_features = 8
    out_features = 32

    key = jax.random.PRNGKey(0)
    k_w, k_x, k_a = jax.random.split(key, 3)

    weight = init_gnn_layer_params(k_w, in_features, out_features)
    features = jax.random.normal(k_x, (num_nodes, in_features), dtype=jnp.float32)

    # Simple symmetric, row-normalized dense adjacency (torch.spmm on a sparse adj
    # is numerically identical to a dense matmul).
    raw = jax.random.uniform(k_a, (num_nodes, num_nodes), dtype=jnp.float32)
    adj = (raw > 0.7).astype(jnp.float32)
    adj = adj + adj.T + jnp.eye(num_nodes, dtype=jnp.float32)
    adj = jnp.clip(adj, 0.0, 1.0)
    adj = adj / jnp.sum(adj, axis=1, keepdims=True)

    out = gnn_layer_forward(features, adj, weight, active=True)
    out = jax.block_until_ready(out)

    # Pure-JAX reference check of the exact forward semantics.
    ref = jnp.maximum(adj @ (features @ weight), 0.0)
    assert out.shape == (num_nodes, out_features)
    assert jnp.allclose(out, ref, atol=1e-5, rtol=1e-5), float(jnp.max(jnp.abs(out - ref)))

    # Also exercise the non-ReLU path.
    out_lin = jax.block_until_ready(gnn_layer_forward(features, adj, weight, active=False))
    ref_lin = adj @ (features @ weight)
    assert jnp.allclose(out_lin, ref_lin, atol=1e-5, rtol=1e-5)

    print("KERNEL_OK")
</pallas_src>

<mosaic_0001>
module attributes {stable_mosaic.version = 11 : i64} {
  func.func @_matmul_kernel(%arg0: i32, %arg1: i32, %arg2: i32, %arg3: memref<16x128xf32, #tpu.memory_space<vmem>>, %arg4: memref<128x128xf32, #tpu.memory_space<vmem>>, %arg5: memref<16x128xf32, #tpu.memory_space<vmem>>, %arg6: memref<16x128xf32, #tpu.memory_space<vmem>>) attributes {dimension_semantics = [#tpu.dimension_semantics<parallel>, #tpu.dimension_semantics<parallel>, #tpu.dimension_semantics<arbitrary>], iteration_bounds = array<i64: 1, 1, 1>, scalar_prefetch = 0 : i64, scratch_operands = 1 : i64, tpu.core_type = #tpu.core_type<tc>, window_params = [{transform_indices = @transform_0, window_bounds = array<i64: 16, 128>}, {transform_indices = @transform_1, window_bounds = array<i64: 128, 128>}, {transform_indices = @transform_2, window_bounds = array<i64: 16, 128>}]} {
    %c0_i32 = arith.constant 0 : i32
    %0 = arith.cmpi eq, %arg2, %c0_i32 : i32
    %1 = arith.extui %0 : i1 to i32
    %c0_i32_0 = arith.constant 0 : i32
    %2 = arith.cmpi ne, %1, %c0_i32_0 : i32
    scf.if %2 {
      %cst_10 = arith.constant 0.000000e+00 : f32
      %12 = vector.broadcast %cst_10 : f32 to vector<16x128xf32>
      %c0_11 = arith.constant 0 : index
      %c0_12 = arith.constant 0 : index
      %13 = vector.load %arg6[%c0_11, %c0_12] : memref<16x128xf32, #tpu.memory_space<vmem>>, vector<16x128xf32>
      tpu.vector_store %arg6[%c0_11, %c0_12], %12 {strides = array<i32>} : memref<16x128xf32, #tpu.memory_space<vmem>>, vector<16x128xf32>,
    } else {
    }
    %c0 = arith.constant 0 : index
    %c0_1 = arith.constant 0 : index
    %3 = vector.load %arg6[%c0, %c0_1] : memref<16x128xf32, #tpu.memory_space<vmem>>, vector<16x128xf32>
    %c0_2 = arith.constant 0 : index
    %c0_3 = arith.constant 0 : index
    %4 = vector.load %arg3[%c0_2, %c0_3] : memref<16x128xf32, #tpu.memory_space<vmem>>, vector<16x128xf32>
    %c0_4 = arith.constant 0 : index
    %c0_5 = arith.constant 0 : index
    %5 = vector.load %arg4[%c0_4, %c0_5] : memref<128x128xf32, #tpu.memory_space<vmem>>, vector<128x128xf32>
    %cst = arith.constant dense<0.000000e+00> : vector<16x128xf32>
    %6 = tpu.matmul %4, %5, %cst {dimension_numbers = #tpu.dot_dimension_numbers<[1], [0], [0], [1], [0, 0, 1, 1], [], []>} : vector<16x128xf32>, vector<128x128xf32>, vector<16x128xf32> -> vector<16x128xf32>
    %7 = arith.addf %3, %6 : vector<16x128xf32>
    %c0_6 = arith.constant 0 : index
    %c0_7 = arith.constant 0 : index
    %8 = vector.load %arg6[%c0_6, %c0_7] : memref<16x128xf32, #tpu.memory_space<vmem>>, vector<16x128xf32>
    tpu.vector_store %arg6[%c0_6, %c0_7], %7 {strides = array<i32>} : memref<16x128xf32, #tpu.memory_space<vmem>>, vector<16x128xf32>,
    %c0_i32_8 = arith.constant 0 : i32
    %9 = arith.cmpi eq, %arg2, %c0_i32_8 : i32
    %10 = arith.extui %9 : i1 to i32
    %c0_i32_9 = arith.constant 0 : i32
    %11 = arith.cmpi ne, %10, %c0_i32_9 : i32
    scf.if %11 {
      %c0_10 = arith.constant 0 : index
      %c0_11 = arith.constant 0 : index
      %12 = vector.load %arg6[%c0_10, %c0_11] : memref<16x128xf32, #tpu.memory_space<vmem>>, vector<16x128xf32>
      %c0_12 = arith.constant 0 : index
      %c0_13 = arith.constant 0 : index
      %13 = vector.load %arg5[%c0_12, %c0_13] : memref<16x128xf32, #tpu.memory_space<vmem>>, vector<16x128xf32>
      tpu.vector_store %arg5[%c0_12, %c0_13], %12 {strides = array<i32>} : memref<16x128xf32, #tpu.memory_space<vmem>>, vector<16x128xf32>,
    } else {
    }
    return
  }
  func.func @transform_0(%arg0: i32, %arg1: i32, %arg2: i32) -> (i32, i32) {
    %c0_i32 = arith.constant 0 : i32
    return %arg0, %arg2 : i32, i32
  }
  func.func @transform_1(%arg0: i32, %arg1: i32, %arg2: i32) -> (i32, i32) {
    %c0_i32 = arith.constant 0 : i32
    return %arg2, %arg1 : i32, i32
  }
  func.func @transform_2(%arg0: i32, %arg1: i32, %arg2: i32) -> (i32, i32) {
    %c0_i32 = arith.constant 0 : i32
    return %arg0, %arg1 : i32, i32
  }
}

</mosaic_0001>

<llo_original>
// kernel: tpu_custom_call.1
$region0: #{tpu_custom_call.1}
  #allocation0 [shape = 'u32[]', space=smem, size = 0x4, offset = 0x4, fixed_abs, tag = 'smem constant byte address 0x4 - core index']
  #allocation1 [shape = 'u32[72,128]{1,0:T(1,128)}', space=vmem, size = 0x9000, scoped, tag = 'internal scratch']
  #allocation2 [shape = 'f32[16,128]{1,0:T(8,128)}', space=vmem, size = 0x2000, scoped, tag = 'scratch operand']
  %s0 = inlined_call_operand.hbm [shape: f32[16,128], index: 0, kind: input, shape index: {}]
  %s1 = inlined_call_operand.hbm [shape: f32[128,128], index: 1, kind: input, shape index: {}]
  %s2 = inlined_call_operand.hbm [shape: f32[16,128], index: 2, kind: output, shape index: {}]
  %s3 = sld [smem:[#allocation0]]
  $region34: #{tpu_custom_call.1} parent=0
    _
  %s5 = ssub.s32 1, %s3
  %s6 = scalar_select 0, %s5, %s3
  $region1: #{tpu_custom_call.1} parent=0
    #allocation3 [shape = 'u8[8192]{0}', space=vmem, size = 0x2000, scoped, tag = 'input window, operand 0, single buffered']
    #allocation4 [shape = 's32[1]{0}', space=sflag, size = 0x4, scoped, tag = 'scoped memory for tpu_custom_call.1']
    #allocation5 [shape = 's32[1]{0}', space=sflag, size = 0x4, scoped, tag = 'scoped memory for tpu_custom_call.1']
    #allocation6 [shape = 'u8[65536]{0}', space=vmem, size = 0x10000, scoped, tag = 'input window, operand 1, single buffered']
    #allocation7 [shape = 's32[1]{0}', space=sflag, size = 0x4, scoped, tag = 'scoped memory for tpu_custom_call.1']
    #allocation8 [shape = 'u8[8192]{0}', space=vmem, size = 0x2000, scoped, tag = 'output window, operand 0, single buffered']
    %7 = vsyncpa [#allocation4], 0
    %8 = vsyncpa [#allocation7], 0
    %9 = vsyncpa [#allocation5], 0
    // Predicated region
    $region2: #{tpu_custom_call.1} parent=1 // pred_check
      _
    $region3: #{tpu_custom_call.1} parent=1 // pred_check_branch
      %11 = sbr.rel (0) target = $region5
    $region4: #{tpu_custom_call.1} parent=1 // pred_region
      %13 = vsyncadd [#allocation4], 0
      %s14 = sshll.u32 %s0, 4
      %s15 = int_to_ptr.hbm [resolvable:$true] %s14
      %s16 = sshll.u32 [#allocation3], 4
      %s17 = int_to_ptr.vmem [resolvable:$true] %s16
      %22 = dma.hbm_to_vmem [thread:$0]  %s15, 256, %s17, [#allocation4], 128, 128, 8
    $region5: #{tpu_custom_call.1} parent=1 // pred_fallthru
      _
    // Predicated region
    $region6: #{tpu_custom_call.1} parent=1 // pred_check
      _
    $region7: #{tpu_custom_call.1} parent=1 // pred_check_branch
      %24 = sbr.rel (0) target = $region9
    $region8: #{tpu_custom_call.1} parent=1 // pred_region
      %26 = vsyncadd [#allocation7], 0
      %s27 = sshll.u32 %s1, 4
      %s28 = int_to_ptr.hbm [resolvable:$true] %s27
      %s29 = sshll.u32 [#allocation6], 4
      %s30 = int_to_ptr.vmem [resolvable:$true] %s29
      %35 = dma.hbm_to_vmem [thread:$0]  %s28, 2048, %s30, [#allocation7], 128, 128, 8
    $region9: #{tpu_custom_call.1} parent=1 // pred_fallthru
      _
    // Predicated region
    $region10: #{tpu_custom_call.1} parent=1 // pred_check
      _
    $region11: #{tpu_custom_call.1} parent=1 // pred_check_branch
      %37 = sbr.rel (0) target = $region13
    $region12: #{tpu_custom_call.1} parent=1 // pred_region
      %39 = dma.done [#allocation4], 256
    $region13: #{tpu_custom_call.1} parent=1 // pred_fallthru
      _
    // Predicated region
    $region14: #{tpu_custom_call.1} parent=1 // pred_check
      _
    $region15: #{tpu_custom_call.1} parent=1 // pred_check_branch
      %41 = sbr.rel (0) target = $region17
    $region16: #{tpu_custom_call.1} parent=1 // pred_region
      %43 = dma.done [#allocation7], 2048
    $region17: #{tpu_custom_call.1} parent=1 // pred_fallthru
      _
    %p44 = scmp.eq.s32.totalorder 0, 0
    // Predicated region
    $region18: #{tpu_custom_call.1} parent=1 // pred_check
      %p45 = pneg %p44
    $region19: #{tpu_custom_call.1} parent=1 // pred_check_branch
      %47 = sbr.rel (%p45) target = $region21
    $region20: #{tpu_custom_call.1} parent=1 // pred_region
      %48 = vst [vmem:[#allocation2] sm:$0xff] 0.0
      %49 = vst [vmem:[#allocation2 + $0x8] sm:$0xff] 0.0
    $region21: #{tpu_custom_call.1} parent=1 // pred_fallthru
      _
    %v50 = vld [vmem:[#allocation2] sm:$0xff]
    %v51 = vld [vmem:[#allocation2 + $0x8] sm:$0xff]
    %v52 = vld [vmem:[#allocation3] sm:$0xff]
    %v53 = vld [vmem:[#allocation3 + $0x8] sm:$0xff]
    %v54 = vld [vmem:[#allocation6] sm:$0xff]
    %v55 = vld [vmem:[#allocation6 + $0x8] sm:$0xff]
    %v56 = vld [vmem:[#allocation6 + $0x10] sm:$0xff]
    %v57 = vld [vmem:[#allocation6 + $0x18] sm:$0xff]
    %v58 = vld [vmem:[#allocation6 + $0x20] sm:$0xff]
    %v59 = vld [vmem:[#allocation6 + $0x28] sm:$0xff]
    %v60 = vld [vmem:[#allocation6 + $0x30] sm:$0xff]
    %v61 = vld [vmem:[#allocation6 + $0x38] sm:$0xff]
    %v62 = vld [vmem:[#allocation6 + $0x40] sm:$0xff]
    %v63 = vld [vmem:[#allocation6 + $0x48] sm:$0xff]
    %v64 = vld [vmem:[#allocation6 + $0x50] sm:$0xff]
    %v65 = vld [vmem:[#allocation6 + $0x58] sm:$0xff]
    %v66 = vld [vmem:[#allocation6 + $0x60] sm:$0xff]
    %v67 = vld [vmem:[#allocation6 + $0x68] sm:$0xff]
    %v68 = vld [vmem:[#allocation6 + $0x70] sm:$0xff]
    %v69 = vld [vmem:[#allocation6 + $0x78] sm:$0xff]
    %70 = vmatpush.msra.mxu0 %v69
    %71 = vmatpush.msra.mxu0 %v68
    %72 = vmatpush.msra.mxu0 %v67
    %73 = vmatpush.msra.mxu0 %v66
    %74 = vmatpush.msra.mxu0 %v65
    %75 = vmatpush.msra.mxu0 %v64
    %76 = vmatpush.msra.mxu0 %v63
    %77 = vmatpush.msra.mxu0 %v62
    %78 = vmatpush.msra.mxu0 %v61
    %79 = vmatpush.msra.mxu0 %v60
    %80 = vmatpush.msra.mxu0 %v59
    %81 = vmatpush.msra.mxu0 %v58
    %82 = vmatpush.msra.mxu0 %v57
    %83 = vmatpush.msra.mxu0 %v56
    %84 = vmatpush.msra.mxu0 %v55
    %85 = vmatpush.msra.mxu0 %v54
    %86 = vmatmul.f32.gmra.mxu0 %v52
    %v87 = vpop.f32.mrf.mxu0
    %v88 = vadd.f32 0.0, %v87
    %89 = vmatmul.f32.gmra.mxu0 %v53
    %v90 = vpop.f32.mrf.mxu0
    %v91 = vadd.f32 0.0, %v90
    %92 = vdwg.mxu0
    %v93 = vadd.f32 %v50, %v88
    %v94 = vadd.f32 %v51, %v91
    %95 = vst [vmem:[#allocation2] sm:$0xff] %v93
    %96 = vst [vmem:[#allocation2 + $0x8] sm:$0xff] %v94
    // Predicated region
    $region22: #{tpu_custom_call.1} parent=1 // pred_check
      %p97 = pneg %p44
    $region23: #{tpu_custom_call.1} parent=1 // pred_check_branch
      %99 = sbr.rel (%p97) target = $region25
    $region24: #{tpu_custom_call.1} parent=1 // pred_region
      %v100 = vld [vmem:[#allocation2] sm:$0xff]
      %v101 = vld [vmem:[#allocation2 + $0x8] sm:$0xff]
      %102 = vst [vmem:[#allocation8] sm:$0xff] %v100
      %103 = vst [vmem:[#allocation8 + $0x8] sm:$0xff] %v101
    $region25: #{tpu_custom_call.1} parent=1 // pred_fallthru
      _
    // Predicated region
    $region26: #{tpu_custom_call.1} parent=1 // pred_check
      _
    $region27: #{tpu_custom_call.1} parent=1 // pred_check_branch
      %105 = sbr.rel (0) target = $region29
    $region28: #{tpu_custom_call.1} parent=1 // pred_region
      %107 = vsyncadd [#allocation5], 0
      %s108 = sshll.u32 [#allocation8], 4
      %s109 = int_to_ptr.vmem [resolvable:$true] %s108
      %s110 = sshll.u32 %s2, 4
      %s111 = int_to_ptr.hbm [resolvable:$true] %s110
      %116 = dma.vmem_to_hbm [thread:$0]  %s109, 256, %s111, [#allocation5], 128, 128, 8
    $region29: #{tpu_custom_call.1} parent=1 // pred_fallthru
      _
    // Predicated region
    $region30: #{tpu_custom_call.1} parent=1 // pred_check
      _
    $region31: #{tpu_custom_call.1} parent=1 // pred_check_branch
      %118 = sbr.rel (0) target = $region33
    $region32: #{tpu_custom_call.1} parent=1 // pred_region
      %120 = dma.done [#allocation5], 256
    $region33: #{tpu_custom_call.1} parent=1 // pred_fallthru
      _
    %121 = vsyncpa [#allocation4], 1
    %122 = vsyncpa [#allocation7], 1
    %123 = vsyncpa [#allocation5], 1

</llo_original>
